<compile_context>
chip_gen: v7x
topology: tpu7x:2x2x1
jax: 0.10.0
libtpu: 0.0.40
codegen_flags: <defaults>
</compile_context>

<pallas_src>
import jax
import jax.numpy as jnp
from jax.experimental import pallas as pl
from jax.experimental.pallas import tpu as pltpu


# ----------------------------------------------------------------------------
# Pallas kernel: fused (patches @ W_scaled) + bias [+ residual] [+ ReLU]
# ----------------------------------------------------------------------------
def _make_mm_bias_kernel(relu: bool, has_res: bool):
    def kernel(*refs):
        if has_res:
            p_ref, w_ref, b_ref, r_ref, o_ref = refs
        else:
            p_ref, w_ref, b_ref, o_ref = refs
        # bf16 x bf16 -> f32 accumulate on the MXU.
        acc = jnp.dot(p_ref[...], w_ref[...], preferred_element_type=jnp.float32)
        acc = acc + b_ref[...]                      # folded-BN bias (f32)
        if has_res:
            acc = acc + r_ref[...].astype(jnp.float32)
        if relu:
            acc = jnp.maximum(acc, 0.0)
        o_ref[...] = acc.astype(o_ref.dtype)
    return kernel


def _round_up(x, m):
    return ((x + m - 1) // m) * m


def fused_conv_bn(patches, w_scaled, bias, residual=None, relu=True,
                  out_dtype=jnp.float32, tm=256):
    """patches: (M, K), w_scaled: (K, Cout) with BN scale pre-folded,
    bias: (Cout,).  residual: optional (M, Cout).  Returns (M, Cout)."""
    M, K = patches.shape
    Cout = w_scaled.shape[1]

    # Lane-dense / MXU-friendly padding.
    Kp = _round_up(K, 128)
    Cp = _round_up(Cout, 128)
    # Adaptive M tile: full-size 256 blocks for large layers (pipelining +
    # megacore sharding), but never pad a small layer past round_up(M, 8).
    tm_eff = min(tm, _round_up(M, 8))
    n_blk = pl.cdiv(M, tm_eff)
    Mp = n_blk * tm_eff

    p = jnp.pad(patches.astype(jnp.bfloat16), ((0, Mp - M), (0, Kp - K)))
    w = jnp.pad(w_scaled.astype(jnp.bfloat16), ((0, Kp - K), (0, Cp - Cout)))
    b = jnp.pad(bias.astype(jnp.float32).reshape(1, Cout),
                ((0, 0), (0, Cp - Cout)))

    in_specs = [
        pl.BlockSpec((tm_eff, Kp), lambda i: (i, 0)),
        # Grid-invariant weights.  NOTE: on v7x (64 MiB VMEM) this spec could
        # take pipeline_mode=pl.Buffered(1) to drop the redundant second
        # weight buffer if VMEM gets tight at large K/Cout.
        pl.BlockSpec((Kp, Cp), lambda i: (0, 0)),
        pl.BlockSpec((1, Cp), lambda i: (0, 0)),
    ]
    args = [p, w, b]
    if residual is not None:
        in_specs.append(pl.BlockSpec((tm_eff, Cp), lambda i: (i, 0)))
        args.append(jnp.pad(residual.astype(jnp.bfloat16),
                            ((0, Mp - M), (0, Cp - Cout))))

    out = pl.pallas_call(
        _make_mm_bias_kernel(relu, residual is not None),
        out_shape=jax.ShapeDtypeStruct((Mp, Cp), out_dtype),
        grid=(n_blk,),
        in_specs=in_specs,
        out_specs=pl.BlockSpec((tm_eff, Cp), lambda i: (i, 0)),
        compiler_params=pltpu.CompilerParams(
            dimension_semantics=("parallel",),
            vmem_limit_bytes=32 * 1024 * 1024,
        ),
    )(*args)
    return out[:M, :Cout]


# ----------------------------------------------------------------------------
# Glue: im2col, BN folding (plain JAX, kept in bf16 where re-read)
# ----------------------------------------------------------------------------
def _im2col_3x3(x_nhwc, stride):
    N, H, W, C = x_nhwc.shape
    k, pad = 3, 1
    Ho = (H + 2 * pad - k) // stride + 1
    Wo = (W + 2 * pad - k) // stride + 1
    xp = jnp.pad(x_nhwc, ((0, 0), (pad, pad), (pad, pad), (0, 0)))
    cols = []
    for kh in range(k):
        for kw in range(k):
            cols.append(
                xp[:, kh:kh + stride * (Ho - 1) + 1:stride,
                      kw:kw + stride * (Wo - 1) + 1:stride, :]
            )
    patches = jnp.concatenate(cols, axis=-1)  # (N, Ho, Wo, 9*C)
    return patches.reshape(N * Ho * Wo, k * k * C), (N, Ho, Wo)


def _fold_bn(bn):
    scale = bn["gamma"] / jnp.sqrt(bn["var"] + bn["eps"])
    bias = bn["beta"] - bn["mean"] * scale
    return scale, bias


def basic_block_forward(x_nchw, params, stride):
    """Pallas implementation of BasicBlock.forward. x_nchw: (N, Cin, H, W)."""
    x = jnp.transpose(x_nchw, (0, 2, 3, 1)).astype(jnp.float32)  # NHWC
    Cin = x.shape[-1]
    w1 = params["conv1_w"]              # (planes, Cin, 3, 3) torch layout
    planes = w1.shape[0]

    # conv1 -> bn1 -> relu1   (BN scale folded into weights)
    s1, b1 = _fold_bn(params["bn1"])
    w1m = jnp.transpose(w1, (2, 3, 1, 0)).reshape(9 * Cin, planes) * s1[None, :]
    x_bf16 = x.astype(jnp.bfloat16)
    p1, (N, Ho, Wo) = _im2col_3x3(x_bf16, stride)
    # out1 is immediately re-read by the conv2 im2col -> keep it in bf16.
    out1 = fused_conv_bn(p1, w1m, b1, relu=True, out_dtype=jnp.bfloat16)

    # conv2 weights with bn2 scale folded in.
    s2, b2 = _fold_bn(params["bn2"])
    w2m = (jnp.transpose(params["conv2_w"], (2, 3, 1, 0))
              .reshape(9 * planes, planes) * s2[None, :])
    p2, _ = _im2col_3x3(out1.reshape(N, Ho, Wo, planes), 1)

    if stride != 1 or Cin != planes:
        # Downsample shortcut: fold the 1x1 conv + its BN into the SAME
        # matmul by concatenating along K:
        #   [p2 | x_strided] @ [[w2*s2], [wsc*ssc]] + (b2 + bsc)
        ssc, bsc = _fold_bn(params["sc_bn"])
        wscm = params["sc_w"].reshape(planes, Cin).T * ssc[None, :]
        psc = x_bf16[:, ::stride, ::stride, :].reshape(N * Ho * Wo, Cin)
        p_cat = jnp.concatenate([p2, psc], axis=1)
        w_cat = jnp.concatenate([w2m, wscm], axis=0)
        out = fused_conv_bn(p_cat, w_cat, b2 + bsc, relu=True)
    else:
        # Identity shortcut accumulated inside the conv2 kernel epilogue.
        residual = x_bf16.reshape(N * Ho * Wo, planes)
        out = fused_conv_bn(p2, w2m, b2, residual=residual, relu=True)

    out = out.reshape(N, Ho, Wo, planes)
    return jnp.transpose(out, (0, 3, 1, 2))  # back to NCHW


# ----------------------------------------------------------------------------
# Pure-JAX reference (lax.conv, f32) for correctness checking
# ----------------------------------------------------------------------------
def _ref_forward(x, params, stride):
    def conv(x, w, s, pad):
        return jax.lax.conv_general_dilated(
            x, w, (s, s), ((pad, pad), (pad, pad)),
            dimension_numbers=("NCHW", "OIHW", "NCHW"))

    def bn(x, p):
        scale = p["gamma"] / jnp.sqrt(p["var"] + p["eps"])
        bias = p["beta"] - p["mean"] * scale
        return x * scale[None, :, None, None] + bias[None, :, None, None]

    Cin = x.shape[1]
    planes = params["conv1_w"].shape[0]
    out = jax.nn.relu(bn(conv(x, params["conv1_w"], stride, 1), params["bn1"]))
    out = bn(conv(out, params["conv2_w"], 1, 1), params["bn2"])
    if stride != 1 or Cin != planes:
        sc = bn(conv(x, params["sc_w"], stride, 0), params["sc_bn"])
    else:
        sc = x
    return jax.nn.relu(out + sc)


# ----------------------------------------------------------------------------
# Deterministic parameter init
# ----------------------------------------------------------------------------
def _init_bn(key, c):
    k1, k2, k3, k4 = jax.random.split(key, 4)
    return {
        "gamma": 0.5 + jax.random.uniform(k1, (c,), jnp.float32),
        "beta": 0.1 * jax.random.normal(k2, (c,), jnp.float32),
        "mean": 0.1 * jax.random.normal(k3, (c,), jnp.float32),
        "var": 0.5 + jax.random.uniform(k4, (c,), jnp.float32),
        "eps": jnp.float32(1e-5),
    }


def init_basic_block(key, in_planes, planes, stride):
    keys = jax.random.split(key, 6)
    params = {
        "conv1_w": 0.1 * jax.random.normal(keys[0], (planes, in_planes, 3, 3), jnp.float32),
        "bn1": _init_bn(keys[1], planes),
        "conv2_w": 0.1 * jax.random.normal(keys[2], (planes, planes, 3, 3), jnp.float32),
        "bn2": _init_bn(keys[3], planes),
    }
    if stride != 1 or in_planes != planes:
        params["sc_w"] = 0.1 * jax.random.normal(keys[4], (planes, in_planes, 1, 1), jnp.float32)
        params["sc_bn"] = _init_bn(keys[5], planes)
    return params


if __name__ == "__main__":
    key = jax.random.PRNGKey(0)
    fwd = jax.jit(basic_block_forward, static_argnames="stride")

    # bf16 matmul operands -> loosened tolerance vs the f32 lax.conv reference
    # (accumulation stays f32 inside the kernel, so error remains bounded).
    RTOL = ATOL = 3e-2

    # Case 1: transition block (stride=2, channel change) -> conv shortcut
    k_x1, k_p1, k_x2, k_p2 = jax.random.split(key, 4)
    x1 = jax.random.normal(k_x1, (2, 4, 16, 16), jnp.float32)
    params1 = init_basic_block(k_p1, in_planes=4, planes=8, stride=2)
    out1 = jax.block_until_ready(fwd(x1, params1, stride=2))
    ref1 = _ref_forward(x1, params1, stride=2)
    assert out1.shape == (2, 8, 8, 8)
    assert jnp.allclose(out1, ref1, rtol=RTOL, atol=ATOL)

    # Case 2: identity-shortcut block (stride=1, same channels)
    x2 = jax.random.normal(k_x2, (2, 8, 16, 16), jnp.float32)
    params2 = init_basic_block(k_p2, in_planes=8, planes=8, stride=1)
    out2 = jax.block_until_ready(fwd(x2, params2, stride=1))
    ref2 = _ref_forward(x2, params2, stride=1)
    assert out2.shape == (2, 8, 16, 16)
    assert jnp.allclose(out2, ref2, rtol=RTOL, atol=ATOL)

    print("KERNEL_OK")
</pallas_src>

<mosaic_0001>
module attributes {stable_mosaic.version = 11 : i64} {
  func.func @kernel(%arg0: i32, %arg1: memref<128x128xbf16, #tpu.memory_space<vmem>>, %arg2: memref<128x128xbf16, #tpu.memory_space<vmem>>, %arg3: memref<1x128xf32, #tpu.memory_space<vmem>>, %arg4: memref<128x128xbf16, #tpu.memory_space<vmem>>) attributes {dimension_semantics = [#tpu.dimension_semantics<parallel>], iteration_bounds = array<i64: 1>, scalar_prefetch = 0 : i64, scratch_operands = 0 : i64, tpu.core_type = #tpu.core_type<tc>, window_params = [{transform_indices = @transform_0, window_bounds = array<i64: 128, 128>}, {pipeline_mode = #tpu.pipeline_mode<synchronous>, transform_indices = @transform_1, window_bounds = array<i64: 128, 128>}, {pipeline_mode = #tpu.pipeline_mode<synchronous>, transform_indices = @transform_2, window_bounds = array<i64: 1, 128>}, {transform_indices = @transform_3, window_bounds = array<i64: 128, 128>}]} {
    %c0 = arith.constant 0 : index
    %c0_0 = arith.constant 0 : index
    %0 = vector.load %arg1[%c0, %c0_0] : memref<128x128xbf16, #tpu.memory_space<vmem>>, vector<128x128xbf16>
    %c0_1 = arith.constant 0 : index
    %c0_2 = arith.constant 0 : index
    %1 = vector.load %arg2[%c0_1, %c0_2] : memref<128x128xbf16, #tpu.memory_space<vmem>>, vector<128x128xbf16>
    %cst = arith.constant dense<0.000000e+00> : vector<128x128xf32>
    %2 = tpu.matmul %0, %1, %cst {dimension_numbers = #tpu.dot_dimension_numbers<[1], [0], [0], [1], [0, 0, 1, 1], [], []>} : vector<128x128xbf16>, vector<128x128xbf16>, vector<128x128xf32> -> vector<128x128xf32>
    %c0_3 = arith.constant 0 : index
    %c0_4 = arith.constant 0 : index
    %3 = vector.load %arg3[%c0_3, %c0_4] : memref<1x128xf32, #tpu.memory_space<vmem>>, vector<1x128xf32>
    %4 = vector.broadcast %3 : vector<1x128xf32> to vector<128x128xf32>
    %5 = arith.addf %2, %4 : vector<128x128xf32>
    %cst_5 = arith.constant 0.000000e+00 : f32
    %6 = vector.broadcast %cst_5 : f32 to vector<128x128xf32>
    %7 = arith.maximumf %5, %6 : vector<128x128xf32>
    %8 = arith.truncf %7 : vector<128x128xf32> to vector<128x128xbf16>
    %c0_6 = arith.constant 0 : index
    %c0_7 = arith.constant 0 : index
    %9 = vector.load %arg4[%c0_6, %c0_7] : memref<128x128xbf16, #tpu.memory_space<vmem>>, vector<128x128xbf16>
    tpu.vector_store %arg4[%c0_6, %c0_7], %8 {strides = array<i32>} : memref<128x128xbf16, #tpu.memory_space<vmem>>, vector<128x128xbf16>,
    return
  }
  func.func @transform_0(%arg0: i32) -> (i32, i32) {
    %c0_i32 = arith.constant 0 : i32
    %c0_i32_0 = arith.constant 0 : i32
    return %arg0, %c0_i32 : i32, i32
  }
  func.func @transform_1(%arg0: i32) -> (i32, i32) {
    %c0_i32 = arith.constant 0 : i32
    %c0_i32_0 = arith.constant 0 : i32
    %c0_i32_1 = arith.constant 0 : i32
    return %c0_i32, %c0_i32_0 : i32, i32
  }
  func.func @transform_2(%arg0: i32) -> (i32, i32) {
    %c0_i32 = arith.constant 0 : i32
    %c0_i32_0 = arith.constant 0 : i32
    %c0_i32_1 = arith.constant 0 : i32
    return %c0_i32, %c0_i32_0 : i32, i32
  }
  func.func @transform_3(%arg0: i32) -> (i32, i32) {
    %c0_i32 = arith.constant 0 : i32
    %c0_i32_0 = arith.constant 0 : i32
    return %arg0, %c0_i32 : i32, i32
  }
}

module attributes {stable_mosaic.version = 11 : i64} {
  func.func @kernel(%arg0: i32, %arg1: memref<128x128xbf16, #tpu.memory_space<vmem>>, %arg2: memref<128x128xbf16, #tpu.memory_space<vmem>>, %arg3: memref<1x128xf32, #tpu.memory_space<vmem>>, %arg4: memref<128x128xf32, #tpu.memory_space<vmem>>) attributes {dimension_semantics = [#tpu.dimension_semantics<parallel>], iteration_bounds = array<i64: 1>, scalar_prefetch = 0 : i64, scratch_operands = 0 : i64, tpu.core_type = #tpu.core_type<tc>, window_params = [{transform_indices = @transform_0, window_bounds = array<i64: 128, 128>}, {pipeline_mode = #tpu.pipeline_mode<synchronous>, transform_indices = @transform_1, window_bounds = array<i64: 128, 128>}, {pipeline_mode = #tpu.pipeline_mode<synchronous>, transform_indices = @transform_2, window_bounds = array<i64: 1, 128>}, {transform_indices = @transform_3, window_bounds = array<i64: 128, 128>}]} {
    %c0 = arith.constant 0 : index
    %c0_0 = arith.constant 0 : index
    %0 = vector.load %arg1[%c0, %c0_0] : memref<128x128xbf16, #tpu.memory_space<vmem>>, vector<128x128xbf16>
    %c0_1 = arith.constant 0 : index
    %c0_2 = arith.constant 0 : index
    %1 = vector.load %arg2[%c0_1, %c0_2] : memref<128x128xbf16, #tpu.memory_space<vmem>>, vector<128x128xbf16>
    %cst = arith.constant dense<0.000000e+00> : vector<128x128xf32>
    %2 = tpu.matmul %0, %1, %cst {dimension_numbers = #tpu.dot_dimension_numbers<[1], [0], [0], [1], [0, 0, 1, 1], [], []>} : vector<128x128xbf16>, vector<128x128xbf16>, vector<128x128xf32> -> vector<128x128xf32>
    %c0_3 = arith.constant 0 : index
    %c0_4 = arith.constant 0 : index
    %3 = vector.load %arg3[%c0_3, %c0_4] : memref<1x128xf32, #tpu.memory_space<vmem>>, vector<1x128xf32>
    %4 = vector.broadcast %3 : vector<1x128xf32> to vector<128x128xf32>
    %5 = arith.addf %2, %4 : vector<128x128xf32>
    %cst_5 = arith.constant 0.000000e+00 : f32
    %6 = vector.broadcast %cst_5 : f32 to vector<128x128xf32>
    %7 = arith.maximumf %5, %6 : vector<128x128xf32>
    %c0_6 = arith.constant 0 : index
    %c0_7 = arith.constant 0 : index
    %8 = vector.load %arg4[%c0_6, %c0_7] : memref<128x128xf32, #tpu.memory_space<vmem>>, vector<128x128xf32>
    tpu.vector_store %arg4[%c0_6, %c0_7], %7 {strides = array<i32>} : memref<128x128xf32, #tpu.memory_space<vmem>>, vector<128x128xf32>,
    return
  }
  func.func @transform_0(%arg0: i32) -> (i32, i32) {
    %c0_i32 = arith.constant 0 : i32
    %c0_i32_0 = arith.constant 0 : i32
    return %arg0, %c0_i32 : i32, i32
  }
  func.func @transform_1(%arg0: i32) -> (i32, i32) {
    %c0_i32 = arith.constant 0 : i32
    %c0_i32_0 = arith.constant 0 : i32
    %c0_i32_1 = arith.constant 0 : i32
    return %c0_i32, %c0_i32_0 : i32, i32
  }
  func.func @transform_2(%arg0: i32) -> (i32, i32) {
    %c0_i32 = arith.constant 0 : i32
    %c0_i32_0 = arith.constant 0 : i32
    %c0_i32_1 = arith.constant 0 : i32
    return %c0_i32, %c0_i32_0 : i32, i32
  }
  func.func @transform_3(%arg0: i32) -> (i32, i32) {
    %c0_i32 = arith.constant 0 : i32
    %c0_i32_0 = arith.constant 0 : i32
    return %arg0, %c0_i32 : i32, i32
  }
}

</mosaic_0001>

<llo_original>
// kernel: basic_block_forward.2
$region0: #{basic_block_forward.2}
  #allocation0 [shape = 'u32[]', space=smem, size = 0x4, offset = 0x4, fixed_abs, tag = 'smem constant byte address 0x4 - core index']
  #allocation1 [shape = 'u32[144,128]{1,0:T(1,128)}', space=vmem, size = 0x12000, scoped, tag = 'internal scratch']
  %s0 = inlined_call_operand.vmem [shape: bf16[128,128], index: 0, kind: input, shape index: {}]
  %s1 = inlined_call_operand.vmem [shape: bf16[128,128], index: 1, kind: input, shape index: {}]
  %s2 = inlined_call_operand.vmem [shape: f32[1,128], index: 2, kind: input, shape index: {}]
  %s3 = inlined_call_operand.vmem [shape: bf16[128,128], index: 3, kind: output, shape index: {}]
  %s4 = sld [smem:[#allocation0]]
  $region22: #{basic_block_forward.2} parent=0
    _
  %s6 = ssub.s32 1, %s4
  %s7 = scalar_select 0, %s6, %s4
  // Predicated region
  $region2: #{basic_block_forward.2} parent=0 // pred_check
    _
  $region3: #{basic_block_forward.2} parent=0 // pred_check_branch
    %9 = sbr.rel (0) target = $region5
  $region4: #{basic_block_forward.2} parent=0 // pred_region
    _
  $region5: #{basic_block_forward.2} parent=0 // pred_fallthru
    _
  // Predicated region
  $region6: #{basic_block_forward.2} parent=0 // pred_check
    _
  $region7: #{basic_block_forward.2} parent=0 // pred_check_branch
    %11 = sbr.rel (0) target = $region9
  $region8: #{basic_block_forward.2} parent=0 // pred_region
    _
  $region9: #{basic_block_forward.2} parent=0 // pred_fallthru
    _
  // Predicated region
  $region10: #{basic_block_forward.2} parent=0 // pred_check
    _
  $region11: #{basic_block_forward.2} parent=0 // pred_check_branch
    %13 = sbr.rel (0) target = $region13
  $region12: #{basic_block_forward.2} parent=0 // pred_region
    _
  $region13: #{basic_block_forward.2} parent=0 // pred_fallthru
    _
  %v15 = vld [vmem:[%s0] sm:$0xf]
  %v16 = vld [vmem:[%s0 + $0x4] sm:$0xf]
  %v17 = vld [vmem:[%s0 + $0x8] sm:$0xf]
  %v18 = vld [vmem:[%s0 + $0xc] sm:$0xf]
  %v19 = vld [vmem:[%s0 + $0x10] sm:$0xf]
  %v20 = vld [vmem:[%s0 + $0x14] sm:$0xf]
  %v21 = vld [vmem:[%s0 + $0x18] sm:$0xf]
  %v22 = vld [vmem:[%s0 + $0x1c] sm:$0xf]
  %v23 = vld [vmem:[%s0 + $0x20] sm:$0xf]
  %v24 = vld [vmem:[%s0 + $0x24] sm:$0xf]
  %v25 = vld [vmem:[%s0 + $0x28] sm:$0xf]
  %v26 = vld [vmem:[%s0 + $0x2c] sm:$0xf]
  %v27 = vld [vmem:[%s0 + $0x30] sm:$0xf]
  %v28 = vld [vmem:[%s0 + $0x34] sm:$0xf]
  %v29 = vld [vmem:[%s0 + $0x38] sm:$0xf]
  %v30 = vld [vmem:[%s0 + $0x3c] sm:$0xf]
  %v31 = vld [vmem:[%s1] sm:$0xf]
  %v32 = vld [vmem:[%s1 + $0x4] sm:$0xf]
  %v33 = vld [vmem:[%s1 + $0x8] sm:$0xf]
  %v34 = vld [vmem:[%s1 + $0xc] sm:$0xf]
  %v35 = vld [vmem:[%s1 + $0x10] sm:$0xf]
  %v36 = vld [vmem:[%s1 + $0x14] sm:$0xf]
  %v37 = vld [vmem:[%s1 + $0x18] sm:$0xf]
  %v38 = vld [vmem:[%s1 + $0x1c] sm:$0xf]
  %v39 = vld [vmem:[%s1 + $0x20] sm:$0xf]
  %v40 = vld [vmem:[%s1 + $0x24] sm:$0xf]
  %v41 = vld [vmem:[%s1 + $0x28] sm:$0xf]
  %v42 = vld [vmem:[%s1 + $0x2c] sm:$0xf]
  %v43 = vld [vmem:[%s1 + $0x30] sm:$0xf]
  %v44 = vld [vmem:[%s1 + $0x34] sm:$0xf]
  %v45 = vld [vmem:[%s1 + $0x38] sm:$0xf]
  %v46 = vld [vmem:[%s1 + $0x3c] sm:$0xf]
  %v47 = vld [vmem:[%s2] sm:$0x1]
  %v49 = vlaneseq
  %v50 = vshrl.u32 %v49, 7
  %v51 = vsub.s32 0, %v50
  %v52 = vrot.slane %v47, %v51
  %v70 = vunpack.c.l.b16 %v15
  %v71 = vunpack.c.l.b16 %v16
  %v72 = vunpack.c.l.b16 %v17
  %v73 = vunpack.c.l.b16 %v18
  %v74 = vunpack.c.l.b16 %v19
  %v75 = vunpack.c.l.b16 %v20
  %v76 = vunpack.c.l.b16 %v21
  %v77 = vunpack.c.l.b16 %v22
  %v78 = vunpack.c.l.b16 %v23
  %v79 = vunpack.c.l.b16 %v24
  %v80 = vunpack.c.l.b16 %v25
  %v81 = vunpack.c.l.b16 %v26
  %v82 = vunpack.c.l.b16 %v27
  %v83 = vunpack.c.l.b16 %v28
  %v84 = vunpack.c.l.b16 %v29
  %v85 = vunpack.c.l.b16 %v30
  %v86 = vpack.c.b16 %v71, %v70
  %v87 = vpack.c.b16 %v73, %v72
  %v88 = vpack.c.b16 %v75, %v74
  %v89 = vpack.c.b16 %v77, %v76
  %v90 = vpack.c.b16 %v79, %v78
  %v91 = vpack.c.b16 %v81, %v80
  %v92 = vpack.c.b16 %v83, %v82
  %v93 = vpack.c.b16 %v85, %v84
  %v118 = vunpack.c.l.b16 %v31
  %v119 = vunpack.c.l.b16 %v32
  %v120 = vunpack.c.l.b16 %v33
  %v121 = vunpack.c.l.b16 %v34
  %v122 = vunpack.c.l.b16 %v35
  %v123 = vunpack.c.l.b16 %v36
  %v124 = vunpack.c.l.b16 %v37
  %v125 = vunpack.c.l.b16 %v38
  %v126 = vunpack.c.l.b16 %v39
  %v127 = vunpack.c.l.b16 %v40
  %v128 = vunpack.c.l.b16 %v41
  %v129 = vunpack.c.l.b16 %v42
  %v130 = vunpack.c.l.b16 %v43
  %v131 = vunpack.c.l.b16 %v44
  %v132 = vunpack.c.l.b16 %v45
  %v133 = vunpack.c.l.b16 %v46
  %v134 = vpack.c.b16 %v119, %v118
  %v135 = vpack.c.b16 %v121, %v120
  %v136 = vpack.c.b16 %v123, %v122
  %v137 = vpack.c.b16 %v125, %v124
  %v138 = vpack.c.b16 %v127, %v126
  %v139 = vpack.c.b16 %v129, %v128
  %v140 = vpack.c.b16 %v131, %v130
  %v141 = vpack.c.b16 %v133, %v132
  %150 = vmatprep.subr.bf16.mxu0 0
  %151 = vmatpush1.bf16.msra.mxu0 %v134
  %152 = vmatprep.subr.bf16.mxu0 0
  %153 = vmatpush1.bf16.msra.mxu0 %v135
  %154 = vmatprep.subr.bf16.mxu0 0
  %155 = vmatpush1.bf16.msra.mxu0 %v136
  %156 = vmatprep.subr.bf16.mxu0 0
  %157 = vmatpush1.bf16.msra.mxu0 %v137
  %158 = vmatprep.subr.bf16.mxu0 0
  %159 = vmatpush1.bf16.msra.mxu0 %v138
  %160 = vmatprep.subr.bf16.mxu0 0
  %161 = vmatpush1.bf16.msra.mxu0 %v139
  %162 = vmatprep.subr.bf16.mxu0 0
  %163 = vmatpush1.bf16.msra.mxu0 %v140
  %164 = vmatprep.subr.bf16.mxu0 0
  %165 = vmatpush1.bf16.msra.mxu0 %v141
  %166 = vmatprep.subr.bf16.mxu0 0
  %167 = vmatpush1.bf16.msra.mxu0 0
  %168 = vmatprep.subr.bf16.mxu0 0
  %169 = vmatpush1.bf16.msra.mxu0 0
  %170 = vmatprep.subr.bf16.mxu0 0
  %171 = vmatpush1.bf16.msra.mxu0 0
  %172 = vmatprep.subr.bf16.mxu0 0
  %173 = vmatpush1.bf16.msra.mxu0 0
  %174 = vmatprep.subr.bf16.mxu0 0
  %175 = vmatpush1.bf16.msra.mxu0 0
  %176 = vmatprep.subr.bf16.mxu0 0
  %177 = vmatpush1.bf16.msra.mxu0 0
  %178 = vmatprep.subr.bf16.mxu0 0
  %179 = vmatpush1.bf16.msra.mxu0 0
  %180 = vmatprep.subr.bf16.mxu0 0
  %181 = vmatpush1.bf16.msra.mxu0 0
  %182 = vmatprep.mubr.bf16.mxu0 0
  %183 = vmatmul.mubr.bf16.gmra.mrb[0].mxu0 %v86
  %v184 = vpop.f32.mrb[0].mxu0
  %v185 = vadd.f32 %v52, %v184
  %v186 = vpop.f32.mrb[0].mxu0
  %v187 = vpop.f32.mrb[0].mxu0
  %v188 = vadd.f32 %v52, %v187
  %v189 = vpop.f32.mrb[0].mxu0
  %190 = vmatprep.mubr.bf16.mxu0 0
  %191 = vmatmul.mubr.bf16.gmra.mrb[0].mxu0 %v87
  %v192 = vpop.f32.mrb[0].mxu0
  %v193 = vadd.f32 %v52, %v192
  %v194 = vpop.f32.mrb[0].mxu0
  %v195 = vpop.f32.mrb[0].mxu0
  %v196 = vadd.f32 %v52, %v195
  %v197 = vpop.f32.mrb[0].mxu0
  %198 = vmatprep.mubr.bf16.mxu0 0
  %199 = vmatmul.mubr.bf16.gmra.mrb[0].mxu0 %v88
  %v200 = vpop.f32.mrb[0].mxu0
  %v201 = vadd.f32 %v52, %v200
  %v202 = vpop.f32.mrb[0].mxu0
  %v203 = vpop.f32.mrb[0].mxu0
  %v204 = vadd.f32 %v52, %v203
  %v205 = vpop.f32.mrb[0].mxu0
  %206 = vmatprep.mubr.bf16.mxu0 0
  %207 = vmatmul.mubr.bf16.gmra.mrb[0].mxu0 %v89
  %v208 = vpop.f32.mrb[0].mxu0
  %v209 = vadd.f32 %v52, %v208
  %v210 = vpop.f32.mrb[0].mxu0
  %v211 = vpop.f32.mrb[0].mxu0
  %v212 = vadd.f32 %v52, %v211
  %v213 = vpop.f32.mrb[0].mxu0
  %214 = vmatprep.mubr.bf16.mxu0 0
  %215 = vmatmul.mubr.bf16.gmra.mrb[0].mxu0 %v90
  %v216 = vpop.f32.mrb[0].mxu0
  %v217 = vadd.f32 %v52, %v216
  %v218 = vpop.f32.mrb[0].mxu0
  %v219 = vpop.f32.mrb[0].mxu0
  %v220 = vadd.f32 %v52, %v219
  %v221 = vpop.f32.mrb[0].mxu0
  %222 = vmatprep.mubr.bf16.mxu0 0
  %223 = vmatmul.mubr.bf16.gmra.mrb[0].mxu0 %v91
  %v224 = vpop.f32.mrb[0].mxu0
  %v225 = vadd.f32 %v52, %v224
  %v226 = vpop.f32.mrb[0].mxu0
  %v227 = vpop.f32.mrb[0].mxu0
  %v228 = vadd.f32 %v52, %v227
  %v229 = vpop.f32.mrb[0].mxu0
  %230 = vmatprep.mubr.bf16.mxu0 0
  %231 = vmatmul.mubr.bf16.gmra.mrb[0].mxu0 %v92
  %v232 = vpop.f32.mrb[0].mxu0
  %v233 = vadd.f32 %v52, %v232
  %v234 = vpop.f32.mrb[0].mxu0
  %v235 = vpop.f32.mrb[0].mxu0
  %v236 = vadd.f32 %v52, %v235
  %v237 = vpop.f32.mrb[0].mxu0
  %238 = vmatprep.mubr.bf16.mxu0 0
  %239 = vmatmul.mubr.bf16.gmra.mrb[0].mxu0 %v93
  %v240 = vpop.f32.mrb[0].mxu0
  %v241 = vadd.f32 %v52, %v240
  %v242 = vpop.f32.mrb[0].mxu0
  %v243 = vpop.f32.mrb[0].mxu0
  %v244 = vadd.f32 %v52, %v243
  %v245 = vpop.f32.mrb[0].mxu0
  %246 = vdwg.mxu0
  %v247 = vmax.f32 %v185, 0.0
  %v248 = vmax.f32 %v188, 0.0
  %v249 = vmax.f32 %v193, 0.0
  %v250 = vmax.f32 %v196, 0.0
  %v251 = vmax.f32 %v201, 0.0
  %v252 = vmax.f32 %v204, 0.0
  %v253 = vmax.f32 %v209, 0.0
  %v254 = vmax.f32 %v212, 0.0
  %v255 = vmax.f32 %v217, 0.0
  %v256 = vmax.f32 %v220, 0.0
  %v257 = vmax.f32 %v225, 0.0
  %v258 = vmax.f32 %v228, 0.0
  %v259 = vmax.f32 %v233, 0.0
  %v260 = vmax.f32 %v236, 0.0
  %v261 = vmax.f32 %v241, 0.0
  %v262 = vmax.f32 %v244, 0.0
  %v263 = vpack.c.bf16 %v248, %v247
  %v264 = vpack.c.bf16 %v250, %v249
  %v265 = vpack.c.bf16 %v252, %v251
  %v266 = vpack.c.bf16 %v254, %v253
  %v267 = vpack.c.bf16 %v256, %v255
  %v268 = vpack.c.bf16 %v258, %v257
  %v269 = vpack.c.bf16 %v260, %v259
  %v270 = vpack.c.bf16 %v262, %v261
  %v279 = vunpack.c.l.b16 %v263
  %v280 = vunpack.c.h.b16 %v263
  %v281 = vunpack.c.l.b16 %v264
  %v282 = vunpack.c.h.b16 %v264
  %v283 = vunpack.c.l.b16 %v265
  %v284 = vunpack.c.h.b16 %v265
  %v285 = vunpack.c.l.b16 %v266
  %v286 = vunpack.c.h.b16 %v266
  %v287 = vunpack.c.l.b16 %v267
  %v288 = vunpack.c.h.b16 %v267
  %v289 = vunpack.c.l.b16 %v268
  %v290 = vunpack.c.h.b16 %v268
  %v291 = vunpack.c.l.b16 %v269
  %v292 = vunpack.c.h.b16 %v269
  %v293 = vunpack.c.l.b16 %v270
  %v294 = vunpack.c.h.b16 %v270
  %v295 = vpack.c.b16 %v279, %v279
  %v296 = vpack.c.b16 %v280, %v280
  %v297 = vpack.c.b16 %v281, %v281
  %v298 = vpack.c.b16 %v282, %v282
  %v299 = vpack.c.b16 %v283, %v283
  %v300 = vpack.c.b16 %v284, %v284
  %v301 = vpack.c.b16 %v285, %v285
  %v302 = vpack.c.b16 %v286, %v286
  %v303 = vpack.c.b16 %v287, %v287
  %v304 = vpack.c.b16 %v288, %v288
  %v305 = vpack.c.b16 %v289, %v289
  %v306 = vpack.c.b16 %v290, %v290
  %v307 = vpack.c.b16 %v291, %v291
  %v308 = vpack.c.b16 %v292, %v292
  %v309 = vpack.c.b16 %v293, %v293
  %v310 = vpack.c.b16 %v294, %v294
  %327 = vst [vmem:[%s3] sm:$0xf] %v295
  %328 = vst [vmem:[%s3 + $0x4] sm:$0xf] %v296
  %329 = vst [vmem:[%s3 + $0x8] sm:$0xf] %v297
  %330 = vst [vmem:[%s3 + $0xc] sm:$0xf] %v298
  %331 = vst [vmem:[%s3 + $0x10] sm:$0xf] %v299
  %332 = vst [vmem:[%s3 + $0x14] sm:$0xf] %v300
  %333 = vst [vmem:[%s3 + $0x18] sm:$0xf] %v301
  %334 = vst [vmem:[%s3 + $0x1c] sm:$0xf] %v302
  %335 = vst [vmem:[%s3 + $0x20] sm:$0xf] %v303
  %336 = vst [vmem:[%s3 + $0x24] sm:$0xf] %v304
  %337 = vst [vmem:[%s3 + $0x28] sm:$0xf] %v305
  %338 = vst [vmem:[%s3 + $0x2c] sm:$0xf] %v306
  %339 = vst [vmem:[%s3 + $0x30] sm:$0xf] %v307
  %340 = vst [vmem:[%s3 + $0x34] sm:$0xf] %v308
  %341 = vst [vmem:[%s3 + $0x38] sm:$0xf] %v309
  %342 = vst [vmem:[%s3 + $0x3c] sm:$0xf] %v310
  // Predicated region
  $region14: #{basic_block_forward.2} parent=0 // pred_check
    _
  $region15: #{basic_block_forward.2} parent=0 // pred_check_branch
    %344 = sbr.rel (0) target = $region17
  $region16: #{basic_block_forward.2} parent=0 // pred_region
    _
  $region17: #{basic_block_forward.2} parent=0 // pred_fallthru
    _
  // Predicated region
  $region18: #{basic_block_forward.2} parent=0 // pred_check
    _
  $region19: #{basic_block_forward.2} parent=0 // pred_check_branch
    %346 = sbr.rel (0) target = $region21
  $region20: #{basic_block_forward.2} parent=0 // pred_region
    _
  $region21: #{basic_block_forward.2} parent=0 // pred_fallthru
    _

// kernel: basic_block_forward.3
$region0: #{basic_block_forward.3}
  #allocation0 [shape = 'u32[]', space=smem, size = 0x4, offset = 0x4, fixed_abs, tag = 'smem constant byte address 0x4 - core index']
  #allocation1 [shape = 'u32[144,128]{1,0:T(1,128)}', space=vmem, size = 0x12000, scoped, tag = 'internal scratch']
  %s0 = inlined_call_operand.vmem [shape: bf16[128,128], index: 0, kind: input, shape index: {}]
  %s1 = inlined_call_operand.vmem [shape: bf16[128,128], index: 1, kind: input, shape index: {}]
  %s2 = inlined_call_operand.vmem [shape: f32[1,128], index: 2, kind: input, shape index: {}]
  %s3 = inlined_call_operand.vmem [shape: f32[128,128], index: 3, kind: output, shape index: {}]
  %s4 = sld [smem:[#allocation0]]
  $region22: #{basic_block_forward.3} parent=0
    _
  %s6 = ssub.s32 1, %s4
  %s7 = scalar_select 0, %s6, %s4
  // Predicated region
  $region2: #{basic_block_forward.3} parent=0 // pred_check
    _
  $region3: #{basic_block_forward.3} parent=0 // pred_check_branch
    %9 = sbr.rel (0) target = $region5
  $region4: #{basic_block_forward.3} parent=0 // pred_region
    _
  $region5: #{basic_block_forward.3} parent=0 // pred_fallthru
    _
  // Predicated region
  $region6: #{basic_block_forward.3} parent=0 // pred_check
    _
  $region7: #{basic_block_forward.3} parent=0 // pred_check_branch
    %11 = sbr.rel (0) target = $region9
  $region8: #{basic_block_forward.3} parent=0 // pred_region
    _
  $region9: #{basic_block_forward.3} parent=0 // pred_fallthru
    _
  // Predicated region
  $region10: #{basic_block_forward.3} parent=0 // pred_check
    _
  $region11: #{basic_block_forward.3} parent=0 // pred_check_branch
    %13 = sbr.rel (0) target = $region13
  $region12: #{basic_block_forward.3} parent=0 // pred_region
    _
  $region13: #{basic_block_forward.3} parent=0 // pred_fallthru
    _
  %v15 = vld [vmem:[%s0] sm:$0xf]
  %v16 = vld [vmem:[%s0 + $0x4] sm:$0xf]
  %v17 = vld [vmem:[%s0 + $0x8] sm:$0xf]
  %v18 = vld [vmem:[%s0 + $0xc] sm:$0xf]
  %v19 = vld [vmem:[%s0 + $0x10] sm:$0xf]
  %v20 = vld [vmem:[%s0 + $0x14] sm:$0xf]
  %v21 = vld [vmem:[%s0 + $0x18] sm:$0xf]
  %v22 = vld [vmem:[%s0 + $0x1c] sm:$0xf]
  %v23 = vld [vmem:[%s0 + $0x20] sm:$0xf]
  %v24 = vld [vmem:[%s0 + $0x24] sm:$0xf]
  %v25 = vld [vmem:[%s0 + $0x28] sm:$0xf]
  %v26 = vld [vmem:[%s0 + $0x2c] sm:$0xf]
  %v27 = vld [vmem:[%s0 + $0x30] sm:$0xf]
  %v28 = vld [vmem:[%s0 + $0x34] sm:$0xf]
  %v29 = vld [vmem:[%s0 + $0x38] sm:$0xf]
  %v30 = vld [vmem:[%s0 + $0x3c] sm:$0xf]
  %v31 = vld [vmem:[%s1] sm:$0xf]
  %v32 = vld [vmem:[%s1 + $0x4] sm:$0xf]
  %v33 = vld [vmem:[%s1 + $0x8] sm:$0xf]
  %v34 = vld [vmem:[%s1 + $0xc] sm:$0xf]
  %v35 = vld [vmem:[%s1 + $0x10] sm:$0xf]
  %v36 = vld [vmem:[%s1 + $0x14] sm:$0xf]
  %v37 = vld [vmem:[%s1 + $0x18] sm:$0xf]
  %v38 = vld [vmem:[%s1 + $0x1c] sm:$0xf]
  %v39 = vld [vmem:[%s1 + $0x20] sm:$0xf]
  %v40 = vld [vmem:[%s1 + $0x24] sm:$0xf]
  %v41 = vld [vmem:[%s1 + $0x28] sm:$0xf]
  %v42 = vld [vmem:[%s1 + $0x2c] sm:$0xf]
  %v43 = vld [vmem:[%s1 + $0x30] sm:$0xf]
  %v44 = vld [vmem:[%s1 + $0x34] sm:$0xf]
  %v45 = vld [vmem:[%s1 + $0x38] sm:$0xf]
  %v46 = vld [vmem:[%s1 + $0x3c] sm:$0xf]
  %v47 = vld [vmem:[%s2] sm:$0x1]
  %v49 = vlaneseq
  %v50 = vshrl.u32 %v49, 7
  %v51 = vsub.s32 0, %v50
  %v52 = vrot.slane %v47, %v51
  %v70 = vunpack.c.l.b16 %v15
  %v71 = vunpack.c.l.b16 %v16
  %v72 = vunpack.c.l.b16 %v17
  %v73 = vunpack.c.l.b16 %v18
  %v74 = vunpack.c.l.b16 %v19
  %v75 = vunpack.c.l.b16 %v20
  %v76 = vunpack.c.l.b16 %v21
  %v77 = vunpack.c.l.b16 %v22
  %v78 = vunpack.c.l.b16 %v23
  %v79 = vunpack.c.l.b16 %v24
  %v80 = vunpack.c.l.b16 %v25
  %v81 = vunpack.c.l.b16 %v26
  %v82 = vunpack.c.l.b16 %v27
  %v83 = vunpack.c.l.b16 %v28
  %v84 = vunpack.c.l.b16 %v29
  %v85 = vunpack.c.l.b16 %v30
  %v86 = vpack.c.b16 %v71, %v70
  %v87 = vpack.c.b16 %v73, %v72
  %v88 = vpack.c.b16 %v75, %v74
  %v89 = vpack.c.b16 %v77, %v76
  %v90 = vpack.c.b16 %v79, %v78
  %v91 = vpack.c.b16 %v81, %v80
  %v92 = vpack.c.b16 %v83, %v82
  %v93 = vpack.c.b16 %v85, %v84
  %v118 = vunpack.c.l.b16 %v31
  %v119 = vunpack.c.l.b16 %v32
  %v120 = vunpack.c.l.b16 %v33
  %v121 = vunpack.c.l.b16 %v34
  %v122 = vunpack.c.l.b16 %v35
  %v123 = vunpack.c.l.b16 %v36
  %v124 = vunpack.c.l.b16 %v37
  %v125 = vunpack.c.l.b16 %v38
  %v126 = vunpack.c.l.b16 %v39
  %v127 = vunpack.c.l.b16 %v40
  %v128 = vunpack.c.l.b16 %v41
  %v129 = vunpack.c.l.b16 %v42
  %v130 = vunpack.c.l.b16 %v43
  %v131 = vunpack.c.l.b16 %v44
  %v132 = vunpack.c.l.b16 %v45
  %v133 = vunpack.c.l.b16 %v46
  %v134 = vpack.c.b16 %v119, %v118
  %v135 = vpack.c.b16 %v121, %v120
  %v136 = vpack.c.b16 %v123, %v122
  %v137 = vpack.c.b16 %v125, %v124
  %v138 = vpack.c.b16 %v127, %v126
  %v139 = vpack.c.b16 %v129, %v128
  %v140 = vpack.c.b16 %v131, %v130
  %v141 = vpack.c.b16 %v133, %v132
  %150 = vmatprep.subr.bf16.mxu0 0
  %151 = vmatpush1.bf16.msra.mxu0 %v134
  %152 = vmatprep.subr.bf16.mxu0 0
  %153 = vmatpush1.bf16.msra.mxu0 %v135
  %154 = vmatprep.subr.bf16.mxu0 0
  %155 = vmatpush1.bf16.msra.mxu0 %v136
  %156 = vmatprep.subr.bf16.mxu0 0
  %157 = vmatpush1.bf16.msra.mxu0 %v137
  %158 = vmatprep.subr.bf16.mxu0 0
  %159 = vmatpush1.bf16.msra.mxu0 %v138
  %160 = vmatprep.subr.bf16.mxu0 0
  %161 = vmatpush1.bf16.msra.mxu0 %v139
  %162 = vmatprep.subr.bf16.mxu0 0
  %163 = vmatpush1.bf16.msra.mxu0 %v140
  %164 = vmatprep.subr.bf16.mxu0 0
  %165 = vmatpush1.bf16.msra.mxu0 %v141
  %166 = vmatprep.subr.bf16.mxu0 0
  %167 = vmatpush1.bf16.msra.mxu0 0
  %168 = vmatprep.subr.bf16.mxu0 0
  %169 = vmatpush1.bf16.msra.mxu0 0
  %170 = vmatprep.subr.bf16.mxu0 0
  %171 = vmatpush1.bf16.msra.mxu0 0
  %172 = vmatprep.subr.bf16.mxu0 0
  %173 = vmatpush1.bf16.msra.mxu0 0
  %174 = vmatprep.subr.bf16.mxu0 0
  %175 = vmatpush1.bf16.msra.mxu0 0
  %176 = vmatprep.subr.bf16.mxu0 0
  %177 = vmatpush1.bf16.msra.mxu0 0
  %178 = vmatprep.subr.bf16.mxu0 0
  %179 = vmatpush1.bf16.msra.mxu0 0
  %180 = vmatprep.subr.bf16.mxu0 0
  %181 = vmatpush1.bf16.msra.mxu0 0
  %182 = vmatprep.mubr.bf16.mxu0 0
  %183 = vmatmul.mubr.bf16.gmra.mrb[0].mxu0 %v86
  %v184 = vpop.f32.mrb[0].mxu0
  %v185 = vadd.f32 %v52, %v184
  %v186 = vpop.f32.mrb[0].mxu0
  %v187 = vpop.f32.mrb[0].mxu0
  %v188 = vadd.f32 %v52, %v187
  %v189 = vpop.f32.mrb[0].mxu0
  %190 = vmatprep.mubr.bf16.mxu0 0
  %191 = vmatmul.mubr.bf16.gmra.mrb[0].mxu0 %v87
  %v192 = vpop.f32.mrb[0].mxu0
  %v193 = vadd.f32 %v52, %v192
  %v194 = vpop.f32.mrb[0].mxu0
  %v195 = vpop.f32.mrb[0].mxu0
  %v196 = vadd.f32 %v52, %v195
  %v197 = vpop.f32.mrb[0].mxu0
  %198 = vmatprep.mubr.bf16.mxu0 0
  %199 = vmatmul.mubr.bf16.gmra.mrb[0].mxu0 %v88
  %v200 = vpop.f32.mrb[0].mxu0
  %v201 = vadd.f32 %v52, %v200
  %v202 = vpop.f32.mrb[0].mxu0
  %v203 = vpop.f32.mrb[0].mxu0
  %v204 = vadd.f32 %v52, %v203
  %v205 = vpop.f32.mrb[0].mxu0
  %206 = vmatprep.mubr.bf16.mxu0 0
  %207 = vmatmul.mubr.bf16.gmra.mrb[0].mxu0 %v89
  %v208 = vpop.f32.mrb[0].mxu0
  %v209 = vadd.f32 %v52, %v208
  %v210 = vpop.f32.mrb[0].mxu0
  %v211 = vpop.f32.mrb[0].mxu0
  %v212 = vadd.f32 %v52, %v211
  %v213 = vpop.f32.mrb[0].mxu0
  %214 = vmatprep.mubr.bf16.mxu0 0
  %215 = vmatmul.mubr.bf16.gmra.mrb[0].mxu0 %v90
  %v216 = vpop.f32.mrb[0].mxu0
  %v217 = vadd.f32 %v52, %v216
  %v218 = vpop.f32.mrb[0].mxu0
  %v219 = vpop.f32.mrb[0].mxu0
  %v220 = vadd.f32 %v52, %v219
  %v221 = vpop.f32.mrb[0].mxu0
  %222 = vmatprep.mubr.bf16.mxu0 0
  %223 = vmatmul.mubr.bf16.gmra.mrb[0].mxu0 %v91
  %v224 = vpop.f32.mrb[0].mxu0
  %v225 = vadd.f32 %v52, %v224
  %v226 = vpop.f32.mrb[0].mxu0
  %v227 = vpop.f32.mrb[0].mxu0
  %v228 = vadd.f32 %v52, %v227
  %v229 = vpop.f32.mrb[0].mxu0
  %230 = vmatprep.mubr.bf16.mxu0 0
  %231 = vmatmul.mubr.bf16.gmra.mrb[0].mxu0 %v92
  %v232 = vpop.f32.mrb[0].mxu0
  %v233 = vadd.f32 %v52, %v232
  %v234 = vpop.f32.mrb[0].mxu0
  %v235 = vpop.f32.mrb[0].mxu0
  %v236 = vadd.f32 %v52, %v235
  %v237 = vpop.f32.mrb[0].mxu0
  %238 = vmatprep.mubr.bf16.mxu0 0
  %239 = vmatmul.mubr.bf16.gmra.mrb[0].mxu0 %v93
  %v240 = vpop.f32.mrb[0].mxu0
  %v241 = vadd.f32 %v52, %v240
  %v242 = vpop.f32.mrb[0].mxu0
  %v243 = vpop.f32.mrb[0].mxu0
  %v244 = vadd.f32 %v52, %v243
  %v245 = vpop.f32.mrb[0].mxu0
  %246 = vdwg.mxu0
  %v247 = vmax.f32 %v185, 0.0
  %v248 = vmax.f32 %v188, 0.0
  %v249 = vmax.f32 %v193, 0.0
  %v250 = vmax.f32 %v196, 0.0
  %v251 = vmax.f32 %v201, 0.0
  %v252 = vmax.f32 %v204, 0.0
  %v253 = vmax.f32 %v209, 0.0
  %v254 = vmax.f32 %v212, 0.0
  %v255 = vmax.f32 %v217, 0.0
  %v256 = vmax.f32 %v220, 0.0
  %v257 = vmax.f32 %v225, 0.0
  %v258 = vmax.f32 %v228, 0.0
  %v259 = vmax.f32 %v233, 0.0
  %v260 = vmax.f32 %v236, 0.0
  %v261 = vmax.f32 %v241, 0.0
  %v262 = vmax.f32 %v244, 0.0
  %263 = vst [vmem:[%s3] sm:$0xff] %v247
  %264 = vst [vmem:[%s3 + $0x8] sm:$0xff] %v248
  %265 = vst [vmem:[%s3 + $0x10] sm:$0xff] %v249
  %266 = vst [vmem:[%s3 + $0x18] sm:$0xff] %v250
  %267 = vst [vmem:[%s3 + $0x20] sm:$0xff] %v251
  %268 = vst [vmem:[%s3 + $0x28] sm:$0xff] %v252
  %269 = vst [vmem:[%s3 + $0x30] sm:$0xff] %v253
  %270 = vst [vmem:[%s3 + $0x38] sm:$0xff] %v254
  %271 = vst [vmem:[%s3 + $0x40] sm:$0xff] %v255
  %272 = vst [vmem:[%s3 + $0x48] sm:$0xff] %v256
  %273 = vst [vmem:[%s3 + $0x50] sm:$0xff] %v257
  %274 = vst [vmem:[%s3 + $0x58] sm:$0xff] %v258
  %275 = vst [vmem:[%s3 + $0x60] sm:$0xff] %v259
  %276 = vst [vmem:[%s3 + $0x68] sm:$0xff] %v260
  %277 = vst [vmem:[%s3 + $0x70] sm:$0xff] %v261
  %278 = vst [vmem:[%s3 + $0x78] sm:$0xff] %v262
  // Predicated region
  $region14: #{basic_block_forward.3} parent=0 // pred_check
    _
  $region15: #{basic_block_forward.3} parent=0 // pred_check_branch
    %280 = sbr.rel (0) target = $region17
  $region16: #{basic_block_forward.3} parent=0 // pred_region
    _
  $region17: #{basic_block_forward.3} parent=0 // pred_fallthru
    _
  // Predicated region
  $region18: #{basic_block_forward.3} parent=0 // pred_check
    _
  $region19: #{basic_block_forward.3} parent=0 // pred_check_branch
    %282 = sbr.rel (0) target = $region21
  $region20: #{basic_block_forward.3} parent=0 // pred_region
    _
  $region21: #{basic_block_forward.3} parent=0 // pred_fallthru
    _

</llo_original>
